<compile_context>
chip_gen: v6e
topology: v6e:2x2x1
jax: 0.10.0
libtpu: 0.0.40
codegen_flags: <defaults>
</compile_context>

<pallas_src>
import math

import jax
import jax.numpy as jnp
from jax.experimental import pallas as pl
from jax.experimental.pallas import tpu as pltpu

_MIB = 1024 * 1024

# Full-array block resident in VMEM (used by the tiny, ungridded calls).
_VMEM_FULL = pl.BlockSpec(memory_space=pltpu.MemorySpace.VMEM)


def _nbytes(*shaped):
    """Total bytes of arrays / ShapeDtypeStructs (for CostEstimate)."""
    total = 0
    for s in shaped:
        total += math.prod(s.shape) * jnp.dtype(s.dtype).itemsize
    return int(total)


def _row_tile_cap():
    """Per-generation tile budget for the streamed grid axis.

    v5e: 16 MiB scoped-VMEM default + 128x128 MXU  -> 256.
    v6e/v7x: 32 MiB scoped default + 256x256 MXU   -> 512
    (512-row bf16 tiles x 2 buffers stay well under half of v7x's 64 MiB).
    Both caps are multiples of 128, so tiled blocks always satisfy the
    (8, 128) block-shape rule; when the dim fits in one block we use the
    full extent (always legal).
    """
    try:
        kind = jax.devices()[0].device_kind.lower()
        if "v5 lite" in kind or "v5e" in kind or "v5lite" in kind:
            return 256
    except Exception:
        pass
    return 512


def _vmem_limit(block_bytes):
    """Scoped-VMEM limit: 2x (double buffering) x 2 (margin) the per-step block
    bytes, floored at the 32 MiB default and capped at v7x's 64 MiB physical."""
    return int(min(64 * _MIB, max(4 * block_bytes, 32 * _MIB)))


# ---------------------------------- kernels ---------------------------------- #
def _hc_direction_kernel(hc_ref, w_ref, o_ref):
    # Single MXU push: [hs | cs] @ blockdiag(Wh^T, Wc^T) -> [h_proj | c_proj].
    # Output slab width is 2H -> lane-dense (full 128-lane stores) for H >= 64.
    o_ref[...] = jnp.dot(
        hc_ref[...], w_ref[...], preferred_element_type=jnp.float32
    ).astype(o_ref.dtype)


def _output_direction_kernel(x_ref, w_ref, o_ref):
    # One streamed row tile of the dominant matmul: (TILE_M, 2H) @ (2H, H).
    o_ref[...] = jnp.dot(
        x_ref[...], w_ref[...], preferred_element_type=jnp.float32
    ).astype(o_ref.dtype)


def _layer_kernel(hs_ref, cs_ref, w_h_ref, w_c_ref, h_o_ref, c_o_ref):
    # One N-tile of each layer projection; the (B, H*Le) activations are
    # resident across the grid, weight N-tiles are streamed.
    h_o_ref[...] = jnp.dot(
        hs_ref[...], w_h_ref[...], preferred_element_type=jnp.float32
    ).astype(h_o_ref.dtype)
    c_o_ref[...] = jnp.dot(
        cs_ref[...], w_c_ref[...], preferred_element_type=jnp.float32
    ).astype(c_o_ref.dtype)


# --------------------------------- wrappers ----------------------------------- #
def hidden_cell_direction_projection(hc2d, w_bd, out_dtype):
    """hc2d: (Mh, 4H) = [hidden | cell]; w_bd: (4H, 2H) block-diagonal."""
    Mh, K = hc2d.shape
    N = w_bd.shape[1]
    out_shape = jax.ShapeDtypeStruct((Mh, N), out_dtype)
    cost = pl.CostEstimate(
        flops=2 * Mh * K * N,
        transcendentals=0,
        bytes_accessed=_nbytes(hc2d, w_bd, out_shape),
    )
    return pl.pallas_call(
        _hc_direction_kernel,
        out_shape=out_shape,
        in_specs=[_VMEM_FULL, _VMEM_FULL],
        out_specs=_VMEM_FULL,
        cost_estimate=cost,
        compiler_params=pltpu.CompilerParams(
            vmem_limit_bytes=_vmem_limit(_nbytes(hc2d, w_bd, out_shape))),
    )(hc2d, w_bd)


def output_direction_projection(x2d, w_t, out_dtype):
    """x2d: (S*B, 2H) row-major flatten of outputs; w_t: (2H, H). Gridded."""
    Mo, K = x2d.shape
    N = w_t.shape[1]
    tile_m = min(Mo, _row_tile_cap())
    grid_m = pl.cdiv(Mo, tile_m)
    out_shape = jax.ShapeDtypeStruct((Mo, N), out_dtype)
    block_bytes = (
        tile_m * K * jnp.dtype(x2d.dtype).itemsize          # streamed input tile
        + K * N * jnp.dtype(w_t.dtype).itemsize             # resident weight
        + tile_m * N * jnp.dtype(out_dtype).itemsize        # output tile
    )
    cost = pl.CostEstimate(
        flops=2 * Mo * K * N,
        transcendentals=0,
        bytes_accessed=_nbytes(x2d, w_t, out_shape),
    )
    return pl.pallas_call(
        _output_direction_kernel,
        out_shape=out_shape,
        grid=(grid_m,),
        in_specs=[
            pl.BlockSpec((tile_m, K), lambda i: (i, 0)),   # streamed row tiles
            pl.BlockSpec((K, N), lambda i: (0, 0)),        # weight stays resident
        ],
        out_specs=pl.BlockSpec((tile_m, N), lambda i: (i, 0)),
        cost_estimate=cost,
        compiler_params=pltpu.CompilerParams(
            dimension_semantics=("parallel",),   # shard row tiles across v7x's 2 TCs
            vmem_limit_bytes=_vmem_limit(block_bytes)),
    )(x2d, w_t)


def layer_projection(hs2d, cs2d, w_h_t, w_c_t, out_dtype):
    """hs2d/cs2d: (B, H*Le); w_*_t: (H*Le, H*Ld). Gridded over the N axis."""
    B, K = hs2d.shape
    N = w_h_t.shape[1]
    tile_n = min(N, _row_tile_cap())
    grid_n = pl.cdiv(N, tile_n)
    out_shape = (
        jax.ShapeDtypeStruct((B, N), out_dtype),
        jax.ShapeDtypeStruct((B, N), out_dtype),
    )
    block_bytes = (
        2 * B * K * jnp.dtype(hs2d.dtype).itemsize           # resident activations
        + 2 * K * tile_n * jnp.dtype(w_h_t.dtype).itemsize   # streamed weight tiles
        + 2 * B * tile_n * jnp.dtype(out_dtype).itemsize     # output tiles
    )
    cost = pl.CostEstimate(
        flops=2 * 2 * B * K * N,
        transcendentals=0,
        bytes_accessed=_nbytes(hs2d, cs2d, w_h_t, w_c_t, *out_shape),
    )
    return pl.pallas_call(
        _layer_kernel,
        out_shape=out_shape,
        grid=(grid_n,),
        in_specs=[
            pl.BlockSpec((B, K), lambda j: (0, 0)),          # activations resident
            pl.BlockSpec((B, K), lambda j: (0, 0)),
            pl.BlockSpec((K, tile_n), lambda j: (0, j)),     # weight N-tiles streamed
            pl.BlockSpec((K, tile_n), lambda j: (0, j)),
        ],
        out_specs=(
            pl.BlockSpec((B, tile_n), lambda j: (0, j)),
            pl.BlockSpec((B, tile_n), lambda j: (0, j)),
        ),
        cost_estimate=cost,
        compiler_params=pltpu.CompilerParams(
            dimension_semantics=("parallel",),
            vmem_limit_bytes=_vmem_limit(block_bytes)),
    )(hs2d, cs2d, w_h_t, w_c_t)


# ---------------------------------- Projector ---------------------------------- #
class Projector:
    def __init__(self, key, bidirectional, hidden_size, encoder_layers,
                 decoder_layers, param_dtype=jnp.float32,
                 compute_dtype=jnp.bfloat16):
        self.direction = False
        self.layer = False
        self.encoder_layers = encoder_layers
        self.decoder_layers = decoder_layers
        self.hidden_size = hidden_size
        self.compute_dtype = compute_dtype

        keys = jax.random.split(key, 5)

        def init_w(k, out_f, in_f):
            bound = 1.0 / math.sqrt(in_f)  # PyTorch default Linear init range
            return jax.random.uniform(k, (out_f, in_f), param_dtype, -bound, bound)

        if bidirectional:
            self.direction = True
            # PyTorch layout (out_features, in_features), kept for reference math.
            self.hidden_direction_w = init_w(keys[0], hidden_size, hidden_size * 2)
            self.cell_direction_w = init_w(keys[1], hidden_size, hidden_size * 2)
            self.output_direction_w = init_w(keys[2], hidden_size, hidden_size * 2)
            # Pre-transposed, compute-dtype copies for the kernels: y = x @ W.
            self._w_od_t = self.output_direction_w.T.astype(compute_dtype)
            # Block-diagonal (4H, 2H) weight: [hs | cs] @ blockdiag -> [h | c]
            # in ONE MXU push with a lane-dense (2H-wide) output slab.
            H = hidden_size
            w_bd = jnp.zeros((4 * H, 2 * H), compute_dtype)
            w_bd = w_bd.at[: 2 * H, :H].set(
                self.hidden_direction_w.T.astype(compute_dtype))
            w_bd = w_bd.at[2 * H:, H:].set(
                self.cell_direction_w.T.astype(compute_dtype))
            self._w_hc_bd = w_bd

        if decoder_layers is not None and decoder_layers != encoder_layers:
            self.layer = True
            self.hidden_layer_w = init_w(
                keys[3], hidden_size * decoder_layers, hidden_size * encoder_layers)
            self.cell_layer_w = init_w(
                keys[4], hidden_size * decoder_layers, hidden_size * encoder_layers)
            self._w_hl_t = self.hidden_layer_w.T.astype(compute_dtype)
            self._w_cl_t = self.cell_layer_w.T.astype(compute_dtype)

    def __call__(self, outputs, hidden_state, state_cell, batch_size):
        H = self.hidden_size
        Le = self.encoder_layers
        Ld = self.decoder_layers
        cdt = self.compute_dtype

        if self.direction:
            S, B, _ = outputs.shape
            out_dtype = outputs.dtype
            # Contiguous flattening: identical element order to the PyTorch
            # .view(Le, B, 2H); the Linear acts row-wise on the flat 2D view.
            hs2d = hidden_state.reshape(Le * batch_size, H * 2)
            cs2d = state_cell.reshape(Le * batch_size, H * 2)
            hc2d = jnp.concatenate([hs2d, cs2d], axis=1).astype(cdt)
            hc_p = hidden_cell_direction_projection(hc2d, self._w_hc_bd, out_dtype)
            hidden_state = hc_p[:, :H].reshape(Le, batch_size, H)
            state_cell = hc_p[:, H:].reshape(Le, batch_size, H)

            o2d = outputs.reshape(S * B, H * 2).astype(cdt)
            o_p = output_direction_projection(o2d, self._w_od_t, out_dtype)
            outputs = o_p.reshape(S, B, H)

        if self.layer:
            out_dtype = hidden_state.dtype
            # NOTE: this .view-equivalent reshape mixes the layer and batch
            # axes when Le != batch — it faithfully mirrors the PyTorch forward.
            hs2d = hidden_state.reshape(batch_size, H * Le).astype(cdt)
            cs2d = state_cell.reshape(batch_size, H * Le).astype(cdt)
            h_p, c_p = layer_projection(hs2d, cs2d, self._w_hl_t, self._w_cl_t,
                                        out_dtype)
            hidden_state = h_p.reshape(Ld, batch_size, H)
            state_cell = c_p.reshape(Ld, batch_size, H)

        return outputs, hidden_state, state_cell


# ------------------------------------ main ------------------------------------ #
if __name__ == "__main__":
    # Small, forward-consistent shapes
    batch = 2
    hidden = 32
    seq = 8
    encoder_layers = 2
    decoder_layers = 3
    bidirectional = True
    num_dir = 2 if bidirectional else 1

    root = jax.random.PRNGKey(0)
    k_params, k_out, k_h, k_c = jax.random.split(root, 4)

    proj = Projector(k_params, bidirectional, hidden, encoder_layers, decoder_layers)

    # layout: outputs (seq, batch, hidden*num_dir); h/c (enc_layers*num_dir, batch, hidden)
    outputs = jax.random.normal(k_out, (seq, batch, hidden * num_dir), jnp.float32)
    hidden_state = jax.random.normal(
        k_h, (encoder_layers * num_dir, batch, hidden), jnp.float32)
    state_cell = jax.random.normal(
        k_c, (encoder_layers * num_dir, batch, hidden), jnp.float32)

    out, h, c = proj(outputs, hidden_state, state_cell, batch)
    jax.block_until_ready((out, h, c))

    # Pure-JAX f32 reference (same math as the PyTorch forward). The kernel
    # streams bf16 with f32 accumulation, so tolerances are loosened.
    def ref_forward(outputs, hidden_state, state_cell):
        hs = hidden_state.reshape(encoder_layers, batch, hidden * 2)
        cs = state_cell.reshape(encoder_layers, batch, hidden * 2)
        hs = hs @ proj.hidden_direction_w.T
        cs = cs @ proj.cell_direction_w.T
        o = outputs @ proj.output_direction_w.T
        hs = (hs.reshape(batch, hidden * encoder_layers) @ proj.hidden_layer_w.T
              ).reshape(decoder_layers, batch, hidden)
        cs = (cs.reshape(batch, hidden * encoder_layers) @ proj.cell_layer_w.T
              ).reshape(decoder_layers, batch, hidden)
        return o, hs, cs

    o_ref, h_ref, c_ref = ref_forward(outputs, hidden_state, state_cell)
    assert out.shape == (seq, batch, hidden)
    assert h.shape == (decoder_layers, batch, hidden)
    assert c.shape == (decoder_layers, batch, hidden)
    assert jnp.allclose(out, o_ref, atol=5e-2, rtol=5e-2), "outputs mismatch"
    assert jnp.allclose(h, h_ref, atol=5e-2, rtol=5e-2), "hidden mismatch"
    assert jnp.allclose(c, c_ref, atol=5e-2, rtol=5e-2), "cell mismatch"

    print("KERNEL_OK")
</pallas_src>

<mosaic_0001>
module attributes {stable_mosaic.version = 11 : i64} {
  func.func @_hc_direction_kernel(%arg0: memref<4x128xbf16, #tpu.memory_space<vmem>>, %arg1: memref<128x64xbf16, #tpu.memory_space<vmem>>, %arg2: memref<4x64xf32, #tpu.memory_space<vmem>>) attributes {dimension_semantics = [], scalar_prefetch = 0 : i64, scratch_operands = 0 : i64, tpu.core_type = #tpu.core_type<tc>} {
    %c0 = arith.constant 0 : index
    %c0_0 = arith.constant 0 : index
    %0 = vector.load %arg0[%c0, %c0_0] : memref<4x128xbf16, #tpu.memory_space<vmem>>, vector<4x128xbf16>
    %c0_1 = arith.constant 0 : index
    %c0_2 = arith.constant 0 : index
    %1 = vector.load %arg1[%c0_1, %c0_2] : memref<128x64xbf16, #tpu.memory_space<vmem>>, vector<128x64xbf16>
    %cst = arith.constant dense<0.000000e+00> : vector<4x64xf32>
    %2 = tpu.matmul %0, %1, %cst {dimension_numbers = #tpu.dot_dimension_numbers<[1], [0], [0], [1], [0, 0, 1, 1], [], []>} : vector<4x128xbf16>, vector<128x64xbf16>, vector<4x64xf32> -> vector<4x64xf32>
    %c0_3 = arith.constant 0 : index
    %c0_4 = arith.constant 0 : index
    %3 = vector.load %arg2[%c0_3, %c0_4] : memref<4x64xf32, #tpu.memory_space<vmem>>, vector<4x64xf32>
    tpu.vector_store %arg2[%c0_3, %c0_4], %2 {strides = array<i32>} : memref<4x64xf32, #tpu.memory_space<vmem>>, vector<4x64xf32>,
    return
  }
}

</mosaic_0001>

<llo_original>
// kernel: tpu_custom_call.1
$region0: #{tpu_custom_call.1}
  #allocation0 [shape = 'u32[]', space=smem, size = 0x4, offset = 0x4, fixed_abs, tag = 'smem constant byte address 0x4 - core index']
  #allocation1 [shape = 'u32[144,128]{1,0:T(1,128)}', space=vmem, size = 0x12000, scoped, tag = 'internal scratch']
  %s0 = inlined_call_operand.vmem [shape: bf16[4,128], index: 0, kind: input, shape index: {}]
  %s1 = inlined_call_operand.vmem [shape: bf16[128,64], index: 1, kind: input, shape index: {}]
  %s2 = inlined_call_operand.hbm [shape: f32[4,64], index: 2, kind: output, shape index: {}]
  %s3 = sld [smem:[#allocation0]]
  $region18: #{tpu_custom_call.1} parent=0
    _
  %s5 = ssub.s32 1, %s3
  %s6 = scalar_select 0, %s5, %s3
  $region1: #{tpu_custom_call.1} parent=0
    #allocation2 [shape = 'u8[2048]{0}', space=vmem, size = 0x800, scoped, tag = 'output window, operand 0, single buffered']
    #allocation3 [shape = 's32[1]{0}', space=sflag, size = 0x4, scoped, tag = 'scoped memory for tpu_custom_call.1']
    %7 = vsyncpa [#allocation3], 0
    // Predicated region
    $region2: #{tpu_custom_call.1} parent=1 // pred_check
      _
    $region3: #{tpu_custom_call.1} parent=1 // pred_check_branch
      %9 = sbr.rel (0) target = $region5
    $region4: #{tpu_custom_call.1} parent=1 // pred_region
      _
    $region5: #{tpu_custom_call.1} parent=1 // pred_fallthru
      _
    // Predicated region
    $region6: #{tpu_custom_call.1} parent=1 // pred_check
      _
    $region7: #{tpu_custom_call.1} parent=1 // pred_check_branch
      %11 = sbr.rel (0) target = $region9
    $region8: #{tpu_custom_call.1} parent=1 // pred_region
      _
    $region9: #{tpu_custom_call.1} parent=1 // pred_fallthru
      _
    %v13 = vld [vmem:[%s0] sm:$0x3]
    %v14 = vld [vmem:[%s1] sm:$0xf]
    %v15 = vld [vmem:[%s1 + $0x4] sm:$0xf]
    %v16 = vld [vmem:[%s1 + $0x8] sm:$0xf]
    %v17 = vld [vmem:[%s1 + $0xc] sm:$0xf]
    %v18 = vld [vmem:[%s1 + $0x10] sm:$0xf]
    %v19 = vld [vmem:[%s1 + $0x14] sm:$0xf]
    %v20 = vld [vmem:[%s1 + $0x18] sm:$0xf]
    %v21 = vld [vmem:[%s1 + $0x1c] sm:$0xf]
    %v22 = vld [vmem:[%s1 + $0x20] sm:$0xf]
    %v23 = vld [vmem:[%s1 + $0x24] sm:$0xf]
    %v24 = vld [vmem:[%s1 + $0x28] sm:$0xf]
    %v25 = vld [vmem:[%s1 + $0x2c] sm:$0xf]
    %v26 = vld [vmem:[%s1 + $0x30] sm:$0xf]
    %v27 = vld [vmem:[%s1 + $0x34] sm:$0xf]
    %v28 = vld [vmem:[%s1 + $0x38] sm:$0xf]
    %v29 = vld [vmem:[%s1 + $0x3c] sm:$0xf]
    %v46 = vunpack.c.l.b16 %v14
    %v47 = vunpack.c.l.b16 %v15
    %v48 = vunpack.c.l.b16 %v16
    %v49 = vunpack.c.l.b16 %v17
    %v50 = vunpack.c.l.b16 %v18
    %v51 = vunpack.c.l.b16 %v19
    %v52 = vunpack.c.l.b16 %v20
    %v53 = vunpack.c.l.b16 %v21
    %v54 = vunpack.c.l.b16 %v22
    %v55 = vunpack.c.l.b16 %v23
    %v56 = vunpack.c.l.b16 %v24
    %v57 = vunpack.c.l.b16 %v25
    %v58 = vunpack.c.l.b16 %v26
    %v59 = vunpack.c.l.b16 %v27
    %v60 = vunpack.c.l.b16 %v28
    %v61 = vunpack.c.l.b16 %v29
    %v62 = vpack.c.b16 %v47, %v46
    %v63 = vpack.c.b16 %v49, %v48
    %v64 = vpack.c.b16 %v51, %v50
    %v65 = vpack.c.b16 %v53, %v52
    %v66 = vpack.c.b16 %v55, %v54
    %v67 = vpack.c.b16 %v57, %v56
    %v68 = vpack.c.b16 %v59, %v58
    %v69 = vpack.c.b16 %v61, %v60
    %78 = vmatprep.subr.bf16.mxu0 0
    %79 = vmatpush1.bf16.msra.mxu0 %v69
    %80 = vmatprep.subr.bf16.mxu0 0
    %81 = vmatpush1.bf16.msra.mxu0 %v68
    %82 = vmatprep.subr.bf16.mxu0 0
    %83 = vmatpush1.bf16.msra.mxu0 %v67
    %84 = vmatprep.subr.bf16.mxu0 0
    %85 = vmatpush1.bf16.msra.mxu0 %v66
    %86 = vmatprep.subr.bf16.mxu0 0
    %87 = vmatpush1.bf16.msra.mxu0 %v65
    %88 = vmatprep.subr.bf16.mxu0 0
    %89 = vmatpush1.bf16.msra.mxu0 %v64
    %90 = vmatprep.subr.bf16.mxu0 0
    %91 = vmatpush1.bf16.msra.mxu0 %v63
    %92 = vmatprep.subr.bf16.mxu0 0
    %93 = vmatpush1.bf16.msra.mxu0 %v62
    %94 = vmatprep.subr.bf16.mxu0 0
    %95 = vmatpush2.bf16.msra.mxu0 0
    %96 = vmatprep.subr.bf16.mxu0 0
    %97 = vmatpush2.bf16.msra.mxu0 0
    %98 = vmatprep.subr.bf16.mxu0 0
    %99 = vmatpush2.bf16.msra.mxu0 0
    %100 = vmatprep.subr.bf16.mxu0 0
    %101 = vmatpush2.bf16.msra.mxu0 0
    %102 = vmatprep.subr.bf16.mxu0 0
    %103 = vmatpush2.bf16.msra.mxu0 0
    %104 = vmatprep.subr.bf16.mxu0 0
    %105 = vmatpush2.bf16.msra.mxu0 0
    %106 = vmatprep.subr.bf16.mxu0 0
    %107 = vmatpush2.bf16.msra.mxu0 0
    %108 = vmatprep.subr.bf16.mxu0 0
    %109 = vmatpush2.bf16.msra.mxu0 0
    %110 = vmatprep.mubr.bf16.mxu0 0
    %111 = vmatmul.mubr.bf16.gmra.mxu0 %v13
    %v112 = vpop.f32.mrf.mxu0
    %v113 = vadd.f32 0.0, %v112
    %v114 = vpop.f32.mrf.mxu0
    %v115 = vpop.f32.mrf.mxu0
    %v116 = vpop.f32.mrf.mxu0
    %117 = vdwg.mxu0
    %vm118 = vcmask 519168
    %119 = vst.msk [vmem:[#allocation2] sm:$0xf] %vm118, %v113
    // Predicated region
    $region10: #{tpu_custom_call.1} parent=1 // pred_check
      _
    $region11: #{tpu_custom_call.1} parent=1 // pred_check_branch
      %121 = sbr.rel (0) target = $region13
    $region12: #{tpu_custom_call.1} parent=1 // pred_region
      %s123 = ssub.s32 64, 64
      %124 = vsyncadd [#allocation3], %s123
      %s126 = sshll.u32 [#allocation2], 4
      %s127 = int_to_ptr.vmem [resolvable:$true] %s126
      %129 = dma.vmem_to_hbm [thread:$0]  %s127, 64, %s2, [#allocation3]
    $region13: #{tpu_custom_call.1} parent=1 // pred_fallthru
      _
    // Predicated region
    $region14: #{tpu_custom_call.1} parent=1 // pred_check
      _
    $region15: #{tpu_custom_call.1} parent=1 // pred_check_branch
      %131 = sbr.rel (0) target = $region17
    $region16: #{tpu_custom_call.1} parent=1 // pred_region
      %132 = dma.done [#allocation3], 64
    $region17: #{tpu_custom_call.1} parent=1 // pred_fallthru
      _
    %133 = vsyncpa [#allocation3], 1

</llo_original>
